<compile_context>
chip_gen: v7x
topology: tpu7x:2x2x1
jax: 0.10.0
libtpu: 0.0.40
codegen_flags: <defaults>
</compile_context>

<pallas_src>
import functools

import jax
import jax.numpy as jnp
from jax.experimental import pallas as pl
from jax.experimental.pallas import tpu as pltpu

LANE = 128        # feature padding granularity (TPU lanes)
SUBLANE = 16      # row padding granularity (bf16 tile = 16x128; also a multiple of 8)


def _round_up(x: int, m: int) -> int:
    return ((x + m - 1) // m) * m


@functools.lru_cache(maxsize=None)
def _vmem_budget():
    """Per-generation VMEM planning budget + requested scoped-VMEM limit."""
    cap = 64 * 1024 * 1024                      # conservative fallback (v7x per-TC)
    try:
        cap = int(getattr(pltpu.get_tpu_info(), "vmem_capacity_bytes", cap))
    except Exception:
        pass
    limit = max(32 << 20, min((cap * 3) // 4, 112 << 20))   # v5e/v6e ~96 MiB, v7x ~48 MiB
    budget = max(16 << 20, limit - (8 << 20))               # headroom for compiler scratch
    return budget, limit


def _pick_tm(rows_p: int, per_row_bytes: int, fixed_bytes: int, tm_cap: int,
             budget: int) -> int:
    """Largest row tile (multiple of SUBLANE, <= tm_cap) whose tiles + resident
    weights fit the VMEM budget; additionally capped so the parallel row axis
    has >= 2 steps whenever possible (keeps both v7x TensorCores busy)."""
    tm_cap = max(SUBLANE, (int(tm_cap) // SUBLANE) * SUBLANE)
    avail = max(budget - fixed_bytes, per_row_bytes * SUBLANE)
    tm = (avail // per_row_bytes) // SUBLANE * SUBLANE
    tm = int(max(SUBLANE, min(tm, tm_cap, rows_p)))
    if rows_p >= 2 * SUBLANE:
        half = _round_up(-(-rows_p // 2), SUBLANE)     # ceil(rows_p/2) -> sublane
        tm = min(tm, half)
    return max(SUBLANE, tm)


# ---------------------------------------------------------------------------
# Parameter preparation (run ONCE at init; hoists all padding/transpose/stack
# work out of the per-forward path).
# ---------------------------------------------------------------------------
def prepare_inr_mapping_params(first_w, first_b, hid_ws, hid_bs, hid_mbws,
                               conn_w, conn_b):
    """Pack the mapping network + connector into padded, stacked arrays.

    first_w: [hidden, in_f]      (PyTorch Linear weight layout [out, in])
    hid_ws : [n_res, hidden, hidden], hid_bs: [n_res, hidden], hid_mbws: [n_res]
    conn_w : [out_f, hidden],    conn_b: [out_f]
    """
    hid, in_f = first_w.shape
    out_f = conn_w.shape[0]
    n_res = 0 if hid_ws is None else int(hid_ws.shape[0])
    if n_res and (hid_ws.shape[1] != hid or hid_ws.shape[2] != hid):
        raise ValueError("hidden blocks must be square [hidden, hidden]")
    if conn_w.shape[1] != hid:
        raise ValueError("connector input width must equal hidden width")

    # Common padded feature width: exact because padded activation columns stay
    # zero through every layer (zero weight rows/cols + zero bias).
    Dp = max(_round_up(in_f, LANE), _round_up(hid, LANE), _round_up(out_f, LANE))
    L = n_res + 2                                 # first block + residual stack + connector

    w_stack = jnp.zeros((L, Dp, Dp), jnp.bfloat16)
    w_stack = w_stack.at[0, :in_f, :hid].set(first_w.T.astype(jnp.bfloat16))
    if n_res:
        w_stack = w_stack.at[1:1 + n_res, :hid, :hid].set(
            jnp.transpose(hid_ws, (0, 2, 1)).astype(jnp.bfloat16))
    w_stack = w_stack.at[L - 1, :hid, :out_f].set(conn_w.T.astype(jnp.bfloat16))

    b_stack = jnp.zeros((L, 1, Dp), jnp.float32)
    b_stack = b_stack.at[0, 0, :hid].set(first_b.astype(jnp.float32))
    if n_res:
        b_stack = b_stack.at[1:1 + n_res, 0, :hid].set(hid_bs.astype(jnp.float32))
    b_stack = b_stack.at[L - 1, 0, :out_f].set(conn_b.astype(jnp.float32))

    # Per-layer residual gate; 0 for the first block and the connector (unused).
    mbw = jnp.zeros((L,), jnp.float32)
    if n_res:
        mbw = mbw.at[1:1 + n_res].set(jnp.asarray(hid_mbws, jnp.float32))

    meta = dict(in_features=int(in_f), hidden=int(hid), out_features=int(out_f),
                num_layers=int(L), padded_dim=int(Dp))
    return dict(w=w_stack, b=b_stack, mbw=mbw, meta=meta)


# ---------------------------------------------------------------------------
# Fused kernel.  Layer semantics (matches the PyTorch module exactly):
#   l == 0        : h = relu(x @ W0 + b0)                 (is_first_layer -> no residual)
#   0 < l < L-1   : h = h + mbw[l] * relu(h @ Wl + bl)    (INRGeneratorBlock residual)
#   l == L-1      : out = h @ Wl + bl                     (connector: no relu, no residual)
# The activation tile stays in an f32 VMEM scratch across the inner layer axis.
# ---------------------------------------------------------------------------
def _fused_mapping_kernel(x_ref, w_ref, b_ref, mbw_ref, o_ref, act_ref, *, resident):
    l = pl.program_id(1)
    n_l = pl.num_programs(1)

    @pl.when(l == 0)
    def _():
        act_ref[...] = x_ref[...].astype(jnp.float32)

    h = act_ref[...]                                    # (tm, Dp) f32
    if resident:
        w = w_ref[l]                                    # (Dp, Dp) bf16
        b = b_ref[l]                                    # (1, Dp)  f32
    else:
        w = w_ref[0]
        b = b_ref[0]

    y = jnp.dot(h.astype(jnp.bfloat16), w, preferred_element_type=jnp.float32) + b

    is_last = l == n_l - 1
    is_mid = jnp.logical_and(l > 0, jnp.logical_not(is_last))
    y = jnp.where(is_last, y, jnp.maximum(y, 0.0))      # ReLU on every block, not connector
    act_ref[...] = jnp.where(is_mid, h + mbw_ref[l] * y, y)

    @pl.when(is_last)
    def _():
        o_ref[...] = act_ref[...].astype(o_ref.dtype)


def inr_mapping_network(z, params, *, tm_cap=2048, out_dtype=jnp.float32):
    """compute_model_forward: mapping_network (block stack) + connector Linear."""
    meta = params["meta"]
    Dp, L = meta["padded_dim"], meta["num_layers"]
    in_f, out_f = meta["in_features"], meta["out_features"]

    lead = z.shape[:-1]
    z2d = z.reshape(-1, in_f)
    M = z2d.shape[0]
    Mp0 = _round_up(max(M, 1), SUBLANE)

    budget, vmem_limit = _vmem_budget()
    out_bytes = jnp.dtype(out_dtype).itemsize
    w_bytes = L * Dp * Dp * 2
    b_bytes = L * Dp * 4
    # Keep the whole weight stack VMEM-resident if (double-buffer-safe) it uses
    # at most half the budget; otherwise stream per layer with deeper buffering.
    resident = 2 * (w_bytes + b_bytes) <= budget // 2

    per_row = 2 * Dp * 2 + 2 * Dp * out_bytes + Dp * 4   # x/out double-buffered + f32 scratch
    fixed = 2 * (w_bytes + b_bytes) if resident else 3 * (Dp * Dp * 2 + Dp * 4)
    tm = _pick_tm(Mp0, per_row, fixed, tm_cap, budget)
    Mp = _round_up(Mp0, tm)
    n_row_tiles = Mp // tm

    # Only the data-dependent input is padded per forward; weights were padded at init.
    x_pad = jnp.zeros((Mp, Dp), jnp.bfloat16).at[:M, :in_f].set(
        z2d.astype(jnp.bfloat16))
    w_stack, b_stack, mbw = params["w"], params["b"], params["mbw"]

    if resident:
        w_spec = pl.BlockSpec((L, Dp, Dp), lambda i, l: (0, 0, 0))
        b_spec = pl.BlockSpec((L, 1, Dp), lambda i, l: (0, 0, 0))
        wb_traffic = w_bytes + b_bytes
    else:
        w_spec = pl.BlockSpec((1, Dp, Dp), lambda i, l: (l, 0, 0),
                              pipeline_mode=pl.Buffered(3))
        b_spec = pl.BlockSpec((1, 1, Dp), lambda i, l: (l, 0, 0),
                              pipeline_mode=pl.Buffered(3))
        wb_traffic = n_row_tiles * (w_bytes + b_bytes)   # re-streamed per row tile

    cost = pl.CostEstimate(
        flops=2 * Mp * Dp * Dp * L,
        transcendentals=0,
        bytes_accessed=int(x_pad.size * 2 + wb_traffic + mbw.size * 4
                           + Mp * Dp * out_bytes))

    kernel = functools.partial(_fused_mapping_kernel, resident=resident)

    out = pl.pallas_call(
        kernel,
        out_shape=jax.ShapeDtypeStruct((Mp, Dp), out_dtype),
        grid_spec=pltpu.PrefetchScalarGridSpec(
            num_scalar_prefetch=0,
            grid=(n_row_tiles, L),
            in_specs=[
                pl.BlockSpec((tm, Dp), lambda i, l: (i, 0)),   # resident per row tile
                w_spec,
                b_spec,
                # Per-layer residual gates as SMEM scalars (loaded once; no
                # per-layer vector DMA and no (L,1,Dp) broadcast).
                pl.BlockSpec((L,), lambda i, l: (0,), memory_space=pltpu.SMEM),
            ],
            out_specs=pl.BlockSpec((tm, Dp), lambda i, l: (i, 0)),
            scratch_shapes=[pltpu.VMEM((tm, Dp), jnp.float32)],
        ),
        compiler_params=pltpu.CompilerParams(
            dimension_semantics=("parallel", "arbitrary"),
            vmem_limit_bytes=vmem_limit),
        cost_estimate=cost,
    )(x_pad, w_stack, b_stack, mbw)

    return out[:M, :out_f].reshape(*lead, out_f)


if __name__ == "__main__":
    # Small shapes consistent with compute_model_forward(z): z is [batch, input_dim].
    batch = 20            # not a multiple of the row tile -> exercises row padding
    input_dim = 48        # stands in for latent_D*2 + dim_z
    hidden = 32           # stands in for generator_hid_dim
    num_layers = 4        # stands in for generator_num_layers (1 first + 3 residual)
    out_dim = 40          # stands in for inr.num_external_params

    key = jax.random.PRNGKey(0)
    ks = jax.random.split(key, 8)

    z = jax.random.normal(ks[0], (batch, input_dim), dtype=jnp.float32)

    def linear_init(kw, kb, fan_in, fan_out):
        bound = 1.0 / jnp.sqrt(jnp.float32(fan_in))
        w = jax.random.uniform(kw, (fan_out, fan_in), minval=-bound, maxval=bound,
                               dtype=jnp.float32)
        b = jax.random.uniform(kb, (fan_out,), minval=-bound, maxval=bound,
                               dtype=jnp.float32)
        return w, b

    first_w, first_b = linear_init(ks[1], ks[2], input_dim, hidden)

    n_res = num_layers - 1
    wk = jax.random.split(ks[3], n_res)
    bk = jax.random.split(ks[4], n_res)
    hid = [linear_init(wk[l], bk[l], hidden, hidden) for l in range(n_res)]
    hid_ws = jnp.stack([w for w, _ in hid])
    hid_bs = jnp.stack([b for _, b in hid])
    hid_mbws = jnp.full((n_res,), 0.1, jnp.float32)   # nn.Parameter(0.1) per block

    conn_w, conn_b = linear_init(ks[5], ks[6], hidden, out_dim)

    # Pad / stack weights ONCE (hoisted out of the forward path).
    params = prepare_inr_mapping_params(first_w, first_b, hid_ws, hid_bs, hid_mbws,
                                        conn_w, conn_b)
    jax.block_until_ready(params["w"])

    out = inr_mapping_network(z, params)
    jax.block_until_ready(out)
    assert out.shape == (batch, out_dim)

    # --- references --------------------------------------------------------
    def ref_f32(x):
        h = jnp.maximum(x @ first_w.T + first_b, 0.0)
        for l in range(n_res):
            y = jnp.maximum(h @ hid_ws[l].T + hid_bs[l], 0.0)
            h = h + hid_mbws[l] * y
        return h @ conn_w.T + conn_b

    def ref_bf16_matched(x):
        # Matches the kernel numerics: bf16 MXU inputs, f32 accumulation, and
        # f32 activations carried between layers (no bf16 handoff anymore).
        def lin(a, w, b):
            return jnp.dot(a.astype(jnp.bfloat16), w.T.astype(jnp.bfloat16),
                           preferred_element_type=jnp.float32) + b
        h = jnp.maximum(lin(x, first_w, first_b), 0.0)
        for l in range(n_res):
            y = jnp.maximum(lin(h, hid_ws[l], hid_bs[l]), 0.0)
            h = h + hid_mbws[l] * y
        return lin(h, conn_w, conn_b)

    r_match = ref_bf16_matched(z)
    r_f32 = ref_f32(z)
    assert jnp.allclose(out, r_match, atol=2e-3, rtol=2e-3), \
        float(jnp.max(jnp.abs(out - r_match)))
    assert jnp.allclose(out, r_f32, atol=1e-1, rtol=5e-2), \
        float(jnp.max(jnp.abs(out - r_f32)))

    # Larger batch: exercises a bigger row tile, row padding, and the 2-tile
    # "parallel" split that keeps both v7x TensorCores busy.
    z_big = jax.random.normal(ks[7], (200, input_dim), dtype=jnp.float32)
    out_big = inr_mapping_network(z_big, params)
    jax.block_until_ready(out_big)
    assert out_big.shape == (200, out_dim)
    assert jnp.allclose(out_big, ref_bf16_matched(z_big), atol=2e-3, rtol=2e-3)

    # Tiny forced row tile: multi-step parallel axis with the same params.
    out_small = inr_mapping_network(z, params, tm_cap=16)
    jax.block_until_ready(out_small)
    assert jnp.allclose(out_small, r_match, atol=2e-3, rtol=2e-3)

    print("KERNEL_OK")
</pallas_src>

<mosaic_0001>
module attributes {stable_mosaic.version = 11 : i64} {
  func.func @_fused_mapping_kernel(%arg0: i32, %arg1: i32, %arg2: memref<16x128xbf16, #tpu.memory_space<vmem>>, %arg3: memref<5x128x128xbf16, #tpu.memory_space<vmem>>, %arg4: memref<5x1x128xf32, #tpu.memory_space<vmem>>, %arg5: memref<5xf32, #tpu.memory_space<smem>>, %arg6: memref<16x128xf32, #tpu.memory_space<vmem>>, %arg7: memref<16x128xf32, #tpu.memory_space<vmem>>) attributes {dimension_semantics = [#tpu.dimension_semantics<parallel>, #tpu.dimension_semantics<arbitrary>], iteration_bounds = array<i64: 2, 5>, scalar_prefetch = 0 : i64, scratch_operands = 1 : i64, tpu.core_type = #tpu.core_type<tc>, window_params = [{transform_indices = @transform_0, window_bounds = array<i64: 16, 128>}, {pipeline_mode = #tpu.pipeline_mode<synchronous>, transform_indices = @transform_1, window_bounds = array<i64: 5, 128, 128>}, {pipeline_mode = #tpu.pipeline_mode<synchronous>, transform_indices = @transform_2, window_bounds = array<i64: 5, 1, 128>}, {transform_indices = @transform_3, window_bounds = array<i64: 5>}, {transform_indices = @transform_4, window_bounds = array<i64: 16, 128>}]} {
    %c0_i32 = arith.constant 0 : i32
    %0 = arith.cmpi eq, %arg1, %c0_i32 : i32
    %1 = arith.extui %0 : i1 to i32
    %c0_i32_0 = arith.constant 0 : i32
    %2 = arith.cmpi ne, %1, %c0_i32_0 : i32
    scf.if %2 {
      %c0_11 = arith.constant 0 : index
      %c0_12 = arith.constant 0 : index
      %30 = vector.load %arg2[%c0_11, %c0_12] : memref<16x128xbf16, #tpu.memory_space<vmem>>, vector<16x128xbf16>
      %31 = arith.extf %30 : vector<16x128xbf16> to vector<16x128xf32>
      %c0_13 = arith.constant 0 : index
      %c0_14 = arith.constant 0 : index
      %32 = vector.load %arg7[%c0_13, %c0_14] : memref<16x128xf32, #tpu.memory_space<vmem>>, vector<16x128xf32>
      tpu.vector_store %arg7[%c0_13, %c0_14], %31 {strides = array<i32>} : memref<16x128xf32, #tpu.memory_space<vmem>>, vector<16x128xf32>,
    } else {
    }
    %c0 = arith.constant 0 : index
    %c0_1 = arith.constant 0 : index
    %3 = vector.load %arg7[%c0, %c0_1] : memref<16x128xf32, #tpu.memory_space<vmem>>, vector<16x128xf32>
    %4 = arith.index_cast %arg1 : i32 to index
    %c0_2 = arith.constant 0 : index
    %c0_3 = arith.constant 0 : index
    %5 = vector.load %arg3[%4, %c0_2, %c0_3] : memref<5x128x128xbf16, #tpu.memory_space<vmem>>, vector<1x128x128xbf16>
    %6 = vector.shape_cast %5 : vector<1x128x128xbf16> to vector<128x128xbf16>
    %7 = arith.index_cast %arg1 : i32 to index
    %c0_4 = arith.constant 0 : index
    %c0_5 = arith.constant 0 : index
    %8 = vector.load %arg4[%7, %c0_4, %c0_5] : memref<5x1x128xf32, #tpu.memory_space<vmem>>, vector<1x1x128xf32>
    %9 = vector.shape_cast %8 : vector<1x1x128xf32> to vector<1x128xf32>
    %10 = arith.truncf %3 : vector<16x128xf32> to vector<16x128xbf16>
    %cst = arith.constant dense<0.000000e+00> : vector<16x128xf32>
    %11 = tpu.matmul %10, %6, %cst {dimension_numbers = #tpu.dot_dimension_numbers<[1], [0], [0], [1], [0, 0, 1, 1], [], []>} : vector<16x128xbf16>, vector<128x128xbf16>, vector<16x128xf32> -> vector<16x128xf32>
    %12 = vector.broadcast %9 : vector<1x128xf32> to vector<16x128xf32>
    %13 = arith.addf %11, %12 : vector<16x128xf32>
    %c4_i32 = arith.constant 4 : i32
    %14 = arith.cmpi eq, %arg1, %c4_i32 : i32
    %c0_i32_6 = arith.constant 0 : i32
    %15 = arith.cmpi sgt, %arg1, %c0_i32_6 : i32
    %true = arith.constant true
    %16 = arith.xori %14, %true : i1
    %17 = arith.andi %15, %16 : i1
    %cst_7 = arith.constant 0.000000e+00 : f32
    %18 = vector.broadcast %cst_7 : f32 to vector<16x128xf32>
    %19 = arith.maximumf %13, %18 : vector<16x128xf32>
    %20 = arith.select %14, %13, %19 : vector<16x128xf32>
    %21 = arith.index_cast %arg1 : i32 to index
    %22 = memref.load %arg5[%21] : memref<5xf32, #tpu.memory_space<smem>>
    %23 = vector.broadcast %22 : f32 to vector<16x128xf32>
    %24 = arith.mulf %23, %20 : vector<16x128xf32>
    %25 = arith.addf %3, %24 : vector<16x128xf32>
    %26 = arith.select %17, %25, %20 : vector<16x128xf32>
    %c0_8 = arith.constant 0 : index
    %c0_9 = arith.constant 0 : index
    %27 = vector.load %arg7[%c0_8, %c0_9] : memref<16x128xf32, #tpu.memory_space<vmem>>, vector<16x128xf32>
    tpu.vector_store %arg7[%c0_8, %c0_9], %26 {strides = array<i32>} : memref<16x128xf32, #tpu.memory_space<vmem>>, vector<16x128xf32>,
    %28 = arith.extui %14 : i1 to i32
    %c0_i32_10 = arith.constant 0 : i32
    %29 = arith.cmpi ne, %28, %c0_i32_10 : i32
    scf.if %29 {
      %c0_11 = arith.constant 0 : index
      %c0_12 = arith.constant 0 : index
      %30 = vector.load %arg7[%c0_11, %c0_12] : memref<16x128xf32, #tpu.memory_space<vmem>>, vector<16x128xf32>
      %c0_13 = arith.constant 0 : index
      %c0_14 = arith.constant 0 : index
      %31 = vector.load %arg6[%c0_13, %c0_14] : memref<16x128xf32, #tpu.memory_space<vmem>>, vector<16x128xf32>
      tpu.vector_store %arg6[%c0_13, %c0_14], %30 {strides = array<i32>} : memref<16x128xf32, #tpu.memory_space<vmem>>, vector<16x128xf32>,
    } else {
    }
    return
  }
  func.func @transform_0(%arg0: i32, %arg1: i32) -> (i32, i32) {
    %c0_i32 = arith.constant 0 : i32
    %c0_i32_0 = arith.constant 0 : i32
    return %arg0, %c0_i32 : i32, i32
  }
  func.func @transform_1(%arg0: i32, %arg1: i32) -> (i32, i32, i32) {
    %c0_i32 = arith.constant 0 : i32
    %c0_i32_0 = arith.constant 0 : i32
    %c0_i32_1 = arith.constant 0 : i32
    %c0_i32_2 = arith.constant 0 : i32
    return %c0_i32, %c0_i32_0, %c0_i32_1 : i32, i32, i32
  }
  func.func @transform_2(%arg0: i32, %arg1: i32) -> (i32, i32, i32) {
    %c0_i32 = arith.constant 0 : i32
    %c0_i32_0 = arith.constant 0 : i32
    %c0_i32_1 = arith.constant 0 : i32
    %c0_i32_2 = arith.constant 0 : i32
    return %c0_i32, %c0_i32_0, %c0_i32_1 : i32, i32, i32
  }
  func.func @transform_3(%arg0: i32, %arg1: i32) -> i32 {
    %c0_i32 = arith.constant 0 : i32
    %c0_i32_0 = arith.constant 0 : i32
    return %c0_i32 : i32
  }
  func.func @transform_4(%arg0: i32, %arg1: i32) -> (i32, i32) {
    %c0_i32 = arith.constant 0 : i32
    %c0_i32_0 = arith.constant 0 : i32
    return %arg0, %c0_i32 : i32, i32
  }
}

</mosaic_0001>

<llo_original>
// kernel: tpu_custom_call.1
$region0: #{tpu_custom_call.1}
  #allocation0 [shape = 'u32[]', space=smem, size = 0x4, offset = 0x4, fixed_abs, tag = 'smem constant byte address 0x4 - core index']
  #allocation1 [shape = 'u32[144,128]{1,0:T(1,128)}', space=vmem, size = 0x12000, scoped, tag = 'internal scratch']
  #allocation2 [shape = 'f32[16,128]{1,0:T(8,128)}', space=vmem, size = 0x2000, scoped, tag = 'scratch operand']
  %s0 = inlined_call_operand.hbm [shape: bf16[32,128], index: 0, kind: input, shape index: {}]
  %s1 = inlined_call_operand.hbm [shape: bf16[5,128,128], index: 1, kind: input, shape index: {}]
  %s2 = inlined_call_operand.vmem [shape: f32[5,1,128], index: 2, kind: input, shape index: {}]
  %s3 = inlined_call_operand.vmem [shape: f32[5], index: 3, kind: input, shape index: {}]
  %s4 = inlined_call_operand.hbm [shape: f32[32,128], index: 4, kind: output, shape index: {}]
  %s5 = sld [smem:[#allocation0]]
  $region69: #{tpu_custom_call.1} parent=0
    _
  %s7 = ssub.s32 1, %s5
  %s8 = scalar_select 0, %s7, %s5
  $region1: #{tpu_custom_call.1} parent=0
    #allocation3 [shape = 'u8[8192]{0}', space=vmem, size = 0x2000, scoped, tag = 'input window, operand 0']
    #allocation4 [shape = 's32[2]{0}', space=sflag, size = 0x8, scoped, tag = 'scoped memory for tpu_custom_call.1']
    #allocation5 [shape = 's32[2]{0}', space=sflag, size = 0x8, scoped, tag = 'scoped memory for tpu_custom_call.1']
    #allocation6 [shape = 's32[2]{0}', space=sflag, size = 0x8, scoped, tag = 'scoped memory for tpu_custom_call.1']
    #allocation7 [shape = 'u8[163840]{0}', space=vmem, size = 0x28000, scoped, tag = 'input window, operand 1, single buffered']
    #allocation8 [shape = 's32[1]{0}', space=sflag, size = 0x4, scoped, tag = 'scoped memory for tpu_custom_call.1']
    #allocation9 [shape = 'u8[512]{0}', space=smem, size = 0x200, scoped, tag = 'input window, operand 3, single buffered']
    #allocation10 [shape = 'u8[16384]{0}', space=vmem, size = 0x4000, scoped, tag = 'output window, operand 0']
    %9 = vsyncpa [#allocation4], 0
    %s10 = scalar_lea.sflag [#allocation4], 1
    %11 = vsyncpa %s10, 0
    %12 = vsyncpa [#allocation8], 0
    %13 = vsyncpa [#allocation6], 0
    %14 = vsyncpa [#allocation5], 0
    %s15 = scalar_lea.sflag [#allocation5], 1
    %16 = vsyncpa %s15, 0
    loop: start=0, step=1, limit=12
    $region2: #{tpu_custom_call.1} parent=1 // loop_pre_header
      _
    $region3: #{tpu_custom_call.1} parent=1 // loop_header
      %s18 = sphi 0, %s22
      %p19 = scmp.ge.s32.totalorder %s18, 12
      %s25 = sphi 0, %s37
      %s26 = sphi 0, %s33
      %s27 = sphi 0, %s25
      %s28 = sphi 0, %s26
      %s29 = sphi 0, %s27
      %s30 = sphi 0, %s28
      %s40 = sphi 0, %s42
      %s43 = sphi 0, %s40
      %s44 = sphi 0, %s43
      %s60 = sphi 0, %s44
      %s64 = sphi 0, %s64
      %s66 = sphi 0, %s64
      %s67 = sphi 0, %s66
      %s81 = sphi 0, %s67
      %s85 = sphi 0, %s85
      %s87 = sphi 0, %s85
      %s88 = sphi 0, %s87
      %s102 = sphi 0, %s88
      %s106 = sphi 0, %s106
      %s108 = sphi 0, %s106
      %s109 = sphi 0, %s108
      %s123 = sphi 0, %s109
      %s129 = sphi 0, %s131
      %s132 = sphi 0, %s129
      %s133 = sphi 0, %s132
      %s149 = sphi 0, %s133
    $region4: #{tpu_custom_call.1} parent=1 // loop_header_branch
      %21 = sbr.rel (%p19) target = $region8
    $region5: #{tpu_custom_call.1} parent=1 // loop_body
      %s23 = ssub.s32 %s18, 1
      %s24 = ssub.s32 %s18, 2
      %s31 = sadd.s32 1, %s26
      %p32 = scmp.ge.s32.totalorder %s31, 5
      %s33 = scalar_select %p32, 0, %s31
      %s34 = sadd.s32 1, %s25
      %s35 = scalar_select %p32, %s34, %s25
      %p36 = scmp.ge.s32.totalorder %s35, 2
      %s37 = scalar_select %p36, 0, %s35
      %s38 = ssub.s32 %s25, %s37
      %p39 = scmp.eq.s32.totalorder %s38, 0
      %s41 = sadd.s32 %s40, 1
      %s42 = scalar_select %p39, %s40, %s41
      %p45 = pneg %p39
      %p46 = scmp.eq.s32.totalorder %s18, 9
      %p47 = por %p45, %p46
      %p48 = scmp.ne.s32.totalorder %s40, %s43
      %p49 = scmp.eq.s32.totalorder %s18, 0
      %p50 = por %p48, %p49
      %p51 = scmp.ne.s32.totalorder %s40, %s43
      %p52 = scmp.eq.s32.totalorder %s23, 9
      %p53 = por %p51, %p52
      %p54 = scmp.ne.s32.totalorder %s43, %s44
      %p55 = scmp.eq.s32.totalorder %s23, 0
      %p56 = por %p54, %p55
      %p57 = scmp.ne.s32.totalorder %s43, %s44
      %p58 = scmp.eq.s32.totalorder %s24, 9
      %p59 = por %p57, %p58
      %p61 = scmp.ne.s32.totalorder %s44, %s60
      %p62 = scmp.eq.s32.totalorder %s24, 0
      %p63 = por %p61, %p62
      %s65 = sadd.s32 %s64, 1
      %p68 = scmp.eq.s32.totalorder %s18, 9
      %p69 = scmp.ne.s32.totalorder %s64, %s66
      %p70 = scmp.eq.s32.totalorder %s18, 0
      %p71 = por %p69, %p70
      %p72 = scmp.ne.s32.totalorder %s64, %s66
      %p73 = scmp.eq.s32.totalorder %s23, 9
      %p74 = por %p72, %p73
      %p75 = scmp.ne.s32.totalorder %s66, %s67
      %p76 = scmp.eq.s32.totalorder %s23, 0
      %p77 = por %p75, %p76
      %p78 = scmp.ne.s32.totalorder %s66, %s67
      %p79 = scmp.eq.s32.totalorder %s24, 9
      %p80 = por %p78, %p79
      %p82 = scmp.ne.s32.totalorder %s67, %s81
      %p83 = scmp.eq.s32.totalorder %s24, 0
      %p84 = por %p82, %p83
      %s86 = sadd.s32 %s85, 1
      %p89 = scmp.eq.s32.totalorder %s18, 9
      %p90 = scmp.ne.s32.totalorder %s85, %s87
      %p91 = scmp.eq.s32.totalorder %s18, 0
      %p92 = por %p90, %p91
      %p93 = scmp.ne.s32.totalorder %s85, %s87
      %p94 = scmp.eq.s32.totalorder %s23, 9
      %p95 = por %p93, %p94
      %p96 = scmp.ne.s32.totalorder %s87, %s88
      %p97 = scmp.eq.s32.totalorder %s23, 0
      %p98 = por %p96, %p97
      %p99 = scmp.ne.s32.totalorder %s87, %s88
      %p100 = scmp.eq.s32.totalorder %s24, 9
      %p101 = por %p99, %p100
      %p103 = scmp.ne.s32.totalorder %s88, %s102
      %p104 = scmp.eq.s32.totalorder %s24, 0
      %p105 = por %p103, %p104
      %s107 = sadd.s32 %s106, 1
      %p110 = scmp.eq.s32.totalorder %s18, 9
      %p111 = scmp.ne.s32.totalorder %s106, %s108
      %p112 = scmp.eq.s32.totalorder %s18, 0
      %p113 = por %p111, %p112
      %p114 = scmp.ne.s32.totalorder %s106, %s108
      %p115 = scmp.eq.s32.totalorder %s23, 9
      %p116 = por %p114, %p115
      %p117 = scmp.ne.s32.totalorder %s108, %s109
      %p118 = scmp.eq.s32.totalorder %s23, 0
      %p119 = por %p117, %p118
      %p120 = scmp.ne.s32.totalorder %s108, %s109
      %p121 = scmp.eq.s32.totalorder %s24, 9
      %p122 = por %p120, %p121
      %p124 = scmp.ne.s32.totalorder %s109, %s123
      %p125 = scmp.eq.s32.totalorder %s24, 0
      %p126 = por %p124, %p125
      %s127 = ssub.s32 %s25, %s37
      %p128 = scmp.eq.s32.totalorder %s127, 0
      %s130 = sadd.s32 %s129, 1
      %s131 = scalar_select %p128, %s129, %s130
      %p134 = pneg %p128
      %p135 = scmp.eq.s32.totalorder %s18, 9
      %p136 = por %p134, %p135
      %p137 = scmp.ne.s32.totalorder %s129, %s132
      %p138 = scmp.eq.s32.totalorder %s18, 0
      %p139 = por %p137, %p138
      %p140 = scmp.ne.s32.totalorder %s129, %s132
      %p141 = scmp.eq.s32.totalorder %s23, 9
      %p142 = por %p140, %p141
      %p143 = scmp.ne.s32.totalorder %s132, %s133
      %p144 = scmp.eq.s32.totalorder %s23, 0
      %p145 = por %p143, %p144
      %p146 = scmp.ne.s32.totalorder %s132, %s133
      %p147 = scmp.eq.s32.totalorder %s24, 9
      %p148 = por %p146, %p147
      %p150 = scmp.ne.s32.totalorder %s133, %s149
      %p151 = scmp.eq.s32.totalorder %s24, 0
      %p152 = por %p150, %p151
      %p153 = scmp.le.s32.totalorder 1, %s18
      %p154 = scmp.lt.s32.totalorder %s18, 11
      %p155 = pnand %p153, %p154
      %p156 = pneg %p155
      // Predicated region
      $region9: #{tpu_custom_call.1} parent=5 // pred_check
        _
      $region10: #{tpu_custom_call.1} parent=5 // pred_check_branch
        %158 = sbr.rel (%p155) target = $region12
      $region11: #{tpu_custom_call.1} parent=5 // pred_region
        %s159 = ssub.s32 %s18, 1
        // Predicated region
        $region13: #{tpu_custom_call.1} parent=11 // pred_check
          %p160 = pneg %p77
        $region14: #{tpu_custom_call.1} parent=11 // pred_check_branch
          %162 = sbr.rel (%p160) target = $region16
        $region15: #{tpu_custom_call.1} parent=11 // pred_region
          %s164 = ssub.s32 5120, 5120
          %165 = vsyncadd [#allocation8], %s164
          %s166 = sshll.u32 [#allocation7], 4
          %s167 = int_to_ptr.vmem [resolvable:$true] %s166
          %172 = dma.hbm_to_vmem [thread:$0]  %s1, 5120, %s167, [#allocation8], 64, 64, 4
        $region16: #{tpu_custom_call.1} parent=11 // pred_fallthru
          _
        // Predicated region
        $region17: #{tpu_custom_call.1} parent=11 // pred_check
          %p173 = pneg %p98
        $region18: #{tpu_custom_call.1} parent=11 // pred_check_branch
          %175 = sbr.rel (%p173) target = $region20
        $region19: #{tpu_custom_call.1} parent=11 // pred_region
          _
        $region20: #{tpu_custom_call.1} parent=11 // pred_fallthru
          _
        // Predicated region
        $region21: #{tpu_custom_call.1} parent=11 // pred_check
          %p176 = pneg %p119
        $region22: #{tpu_custom_call.1} parent=11 // pred_check_branch
          %178 = sbr.rel (%p176) target = $region24
        $region23: #{tpu_custom_call.1} parent=11 // pred_region
          %s180 = ssub.s32 16, 16
          %181 = vsyncadd [#allocation6], %s180
          %s183 = sshll.u32 %s3, 4
          %s184 = int_to_ptr.vmem [resolvable:$true] %s183
          %186 = dma.vmem_to_smem %s184, 16, [#allocation9], [#allocation6]
        $region24: #{tpu_custom_call.1} parent=11 // pred_fallthru
          _
      $region12: #{tpu_custom_call.1} parent=5 // pred_fallthru
        _
      %p187 = scmp.lt.s32.totalorder %s18, 10
      // Predicated region
      $region25: #{tpu_custom_call.1} parent=5 // pred_check
        %p188 = pneg %p187
      $region26: #{tpu_custom_call.1} parent=5 // pred_check_branch
        %190 = sbr.rel (%p188) target = $region28
      $region27: #{tpu_custom_call.1} parent=5 // pred_region
        // Predicated region
        $region29: #{tpu_custom_call.1} parent=27 // pred_check
          %p191 = pneg %p50
        $region30: #{tpu_custom_call.1} parent=27 // pred_check_branch
          %193 = sbr.rel (%p191) target = $region32
        $region31: #{tpu_custom_call.1} parent=27 // pred_region
          %s194 = sand.u32 %s40, 1
          %s195 = scalar_lea.sflag [#allocation4], %s194
          %s196 = sand.u32 %s40, 1
          %s197 = smul.addr %s196, 8
          %s198 = scalar_lea.vmem [#allocation3], %s197
          %s199 = smul.u32 2, %s25
          %s201 = ssub.s32 128, 128
          %202 = vsyncadd %s195, %s201
          %s203 = smul.addr %s199, 64
          %s204 = scalar_lea.hbm %s0, %s203
          %s205 = sshll.u32 %s198, 4
          %s206 = int_to_ptr.vmem [resolvable:$true] %s205
          %211 = dma.hbm_to_vmem [thread:$0]  %s204, 128, %s206, %s195, 64, 64, 4
        $region32: #{tpu_custom_call.1} parent=27 // pred_fallthru
          _
      $region28: #{tpu_custom_call.1} parent=5 // pred_fallthru
        _
      %p212 = scmp.le.s32.totalorder 1, %s18
      %p213 = scmp.lt.s32.totalorder %s18, 11
      %p214 = pnand %p212, %p213
      %p215 = pneg %p214
      // Predicated region
      $region33: #{tpu_custom_call.1} parent=5 // pred_check
        _
      $region34: #{tpu_custom_call.1} parent=5 // pred_check_branch
        %217 = sbr.rel (%p214) target = $region36
      $region35: #{tpu_custom_call.1} parent=5 // pred_region
        %s218 = ssub.s32 %s18, 1
        %s219 = sand.u32 %s43, 1
        %s220 = scalar_lea.sflag [#allocation4], %s219
        %s221 = sand.u32 %s43, 1
        %s222 = smul.addr %s221, 8
        %s223 = scalar_lea.vmem [#allocation3], %s222
        // Predicated region
        $region37: #{tpu_custom_call.1} parent=35 // pred_check
          %p224 = pneg %p56
        $region38: #{tpu_custom_call.1} parent=35 // pred_check_branch
          %226 = sbr.rel (%p224) target = $region40
        $region39: #{tpu_custom_call.1} parent=35 // pred_region
          %227 = dma.done %s220, 128
        $region40: #{tpu_custom_call.1} parent=35 // pred_fallthru
          _
        // Predicated region
        $region41: #{tpu_custom_call.1} parent=35 // pred_check
          %p228 = pneg %p77
        $region42: #{tpu_custom_call.1} parent=35 // pred_check_branch
          %230 = sbr.rel (%p228) target = $region44
        $region43: #{tpu_custom_call.1} parent=35 // pred_region
          %231 = dma.done [#allocation8], 5120
        $region44: #{tpu_custom_call.1} parent=35 // pred_fallthru
          _
        // Predicated region
        $region45: #{tpu_custom_call.1} parent=35 // pred_check
          %p232 = pneg %p119
        $region46: #{tpu_custom_call.1} parent=35 // pred_check_branch
          %234 = sbr.rel (%p232) target = $region48
        $region47: #{tpu_custom_call.1} parent=35 // pred_region
          %235 = dma.done [#allocation6], 16
        $region48: #{tpu_custom_call.1} parent=35 // pred_fallthru
          _
        %236 = sfence
        %s237 = sand.u32 %s43, 1
        %s238 = scalar_lea.sflag [#allocation4], %s237
        %s239 = sand.u32 %s43, 1
        %s240 = smul.addr %s239, 8
        %s241 = scalar_lea.vmem [#allocation3], %s240
        %p242 = pneg %p56
        %p243 = pneg %p53
        %p244 = pneg %p77
        %p245 = pneg %p74
        %p246 = pneg %p98
        %p247 = pneg %p95
        %p248 = pneg %p119
        %p249 = pneg %p116
        %p250 = pneg %p145
        %p251 = pneg %p142
        %s252 = sand.u32 %s132, 1
        %s253 = scalar_lea.sflag [#allocation5], %s252
        %s254 = sand.u32 %s132, 1
        %s255 = smul.addr %s254, 16
        %s256 = scalar_lea.vmem [#allocation10], %s255
        %s257 = smul.u32 2, %s27
        %s258 = smul.u32 2, %s27
        %p260 = scmp.eq.s32.totalorder %s28, 0
        // Predicated region
        $region49: #{tpu_custom_call.1} parent=35 // pred_check
          %p261 = pneg %p260
        $region50: #{tpu_custom_call.1} parent=35 // pred_check_branch
          %263 = sbr.rel (%p261) target = $region52
        $region51: #{tpu_custom_call.1} parent=35 // pred_region
          %v264 = vld [vmem:[%s223] sm:$0xf]
          %v265 = vld [vmem:[%s223 + $0x4] sm:$0xf]
          %v266 = vunpack.c.l.bf16 %v264
          %v267 = vunpack.c.l.bf16 %v265
          %268 = vst [vmem:[#allocation2] sm:$0xff] %v266
          %269 = vst [vmem:[#allocation2 + $0x8] sm:$0xff] %v267
        $region52: #{tpu_custom_call.1} parent=35 // pred_fallthru
          _
        %v270 = vld [vmem:[#allocation2] sm:$0xff]
        %v271 = vld [vmem:[#allocation2 + $0x8] sm:$0xff]
        %s272 = smul.u32 %s28, 16
        %s273 = smul.addr %s272, 4
        %s274 = scalar_lea.vmem [#allocation7], %s273
        %v275 = vld [vmem:[%s274] sm:$0xf]
        %v276 = vld [vmem:[%s274 + $0x4] sm:$0xf]
        %v277 = vld [vmem:[%s274 + $0x8] sm:$0xf]
        %v278 = vld [vmem:[%s274 + $0xc] sm:$0xf]
        %v279 = vld [vmem:[%s274 + $0x10] sm:$0xf]
        %v280 = vld [vmem:[%s274 + $0x14] sm:$0xf]
        %v281 = vld [vmem:[%s274 + $0x18] sm:$0xf]
        %v282 = vld [vmem:[%s274 + $0x1c] sm:$0xf]
        %v283 = vld [vmem:[%s274 + $0x20] sm:$0xf]
        %v284 = vld [vmem:[%s274 + $0x24] sm:$0xf]
        %v285 = vld [vmem:[%s274 + $0x28] sm:$0xf]
        %v286 = vld [vmem:[%s274 + $0x2c] sm:$0xf]
        %v287 = vld [vmem:[%s274 + $0x30] sm:$0xf]
        %v288 = vld [vmem:[%s274 + $0x34] sm:$0xf]
        %v289 = vld [vmem:[%s274 + $0x38] sm:$0xf]
        %v290 = vld [vmem:[%s274 + $0x3c] sm:$0xf]
        %s291 = scalar_lea.vmem %s2, %s28
        %v292 = vld [vmem:[%s291] sm:$0x1]
        %v293 = vpack.c.bf16 %v271, %v270
        %v295 = vlaneseq
        %v296 = vshrl.u32 %v295, 7
        %v297 = vsub.s32 0, %v296
        %v298 = vrot.slane %v292, %v297
        %v316 = vunpack.c.l.b16 %v275
        %v317 = vunpack.c.l.b16 %v276
        %v318 = vunpack.c.l.b16 %v277
        %v319 = vunpack.c.l.b16 %v278
        %v320 = vunpack.c.l.b16 %v279
        %v321 = vunpack.c.l.b16 %v280
        %v322 = vunpack.c.l.b16 %v281
        %v323 = vunpack.c.l.b16 %v282
        %v324 = vunpack.c.l.b16 %v283
        %v325 = vunpack.c.l.b16 %v284
        %v326 = vunpack.c.l.b16 %v285
        %v327 = vunpack.c.l.b16 %v286
        %v328 = vunpack.c.l.b16 %v287
        %v329 = vunpack.c.l.b16 %v288
        %v330 = vunpack.c.l.b16 %v289
        %v331 = vunpack.c.l.b16 %v290
        %v332 = vpack.c.b16 %v317, %v316
        %v333 = vpack.c.b16 %v319, %v318
        %v334 = vpack.c.b16 %v321, %v320
        %v335 = vpack.c.b16 %v323, %v322
        %v336 = vpack.c.b16 %v325, %v324
        %v337 = vpack.c.b16 %v327, %v326
        %v338 = vpack.c.b16 %v329, %v328
        %v339 = vpack.c.b16 %v331, %v330
        %348 = vmatprep.subr.bf16.mxu0 0
        %349 = vmatpush1.bf16.msra.mxu0 %v332
        %350 = vmatprep.subr.bf16.mxu0 0
        %351 = vmatpush1.bf16.msra.mxu0 %v333
        %352 = vmatprep.subr.bf16.mxu0 0
        %353 = vmatpush1.bf16.msra.mxu0 %v334
        %354 = vmatprep.subr.bf16.mxu0 0
        %355 = vmatpush1.bf16.msra.mxu0 %v335
        %356 = vmatprep.subr.bf16.mxu0 0
        %357 = vmatpush1.bf16.msra.mxu0 %v336
        %358 = vmatprep.subr.bf16.mxu0 0
        %359 = vmatpush1.bf16.msra.mxu0 %v337
        %360 = vmatprep.subr.bf16.mxu0 0
        %361 = vmatpush1.bf16.msra.mxu0 %v338
        %362 = vmatprep.subr.bf16.mxu0 0
        %363 = vmatpush1.bf16.msra.mxu0 %v339
        %364 = vmatprep.subr.bf16.mxu0 0
        %365 = vmatpush1.bf16.msra.mxu0 0
        %366 = vmatprep.subr.bf16.mxu0 0
        %367 = vmatpush1.bf16.msra.mxu0 0
        %368 = vmatprep.subr.bf16.mxu0 0
        %369 = vmatpush1.bf16.msra.mxu0 0
        %370 = vmatprep.subr.bf16.mxu0 0
        %371 = vmatpush1.bf16.msra.mxu0 0
        %372 = vmatprep.subr.bf16.mxu0 0
        %373 = vmatpush1.bf16.msra.mxu0 0
        %374 = vmatprep.subr.bf16.mxu0 0
        %375 = vmatpush1.bf16.msra.mxu0 0
        %376 = vmatprep.subr.bf16.mxu0 0
        %377 = vmatpush1.bf16.msra.mxu0 0
        %378 = vmatprep.subr.bf16.mxu0 0
        %379 = vmatpush1.bf16.msra.mxu0 0
        %380 = vmatprep.mubr.bf16.mxu0 0
        %381 = vmatmul.mubr.bf16.gmra.mrb[0].mxu0 %v293
        %v382 = vpop.f32.mrb[0].mxu0
        %v383 = vadd.f32 %v298, %v382
        %v384 = vpop.f32.mrb[0].mxu0
        %v385 = vpop.f32.mrb[0].mxu0
        %v386 = vadd.f32 %v298, %v385
        %v387 = vpop.f32.mrb[0].mxu0
        %388 = vdwg.mxu0
        %p389 = scmp.eq.s32.totalorder %s28, 4
        %p390 = scmp.gt.s32.totalorder %s28, 0
        %p391 = scmp.ne.s32.totalorder %s28, 4
        %p392 = pnand %p390, %p391
        %p393 = pneg %p392
        %v394 = vmax.f32 %v383, 0.0
        %v395 = vmax.f32 %v386, 0.0
        %s396 = scalar_select %p389, 1, 0
        %v397 = vstv %s396
        %vm398 = vcmp.eq.s32.totalorder %v397, 1
        %v399 = vsel %vm398, %v383, %v394
        %v400 = vsel %vm398, %v386, %v395
        %s401 = sld [smem:[#allocation9 + %s28]]
        %v402 = vstv %s401
        %v403 = vmul.f32 %v402, %v399
        %v404 = vmul.f32 %v402, %v400
        %v405 = vadd.f32 %v270, %v403
        %v406 = vadd.f32 %v271, %v404
        %s407 = scalar_select %p393, 1, 0
        %v408 = vstv %s407
        %vm409 = vcmp.eq.s32.totalorder %v408, 1
        %v410 = vsel %vm409, %v405, %v399
        %v411 = vsel %vm409, %v406, %v400
        %412 = vst [vmem:[#allocation2] sm:$0xff] %v410
        %413 = vst [vmem:[#allocation2 + $0x8] sm:$0xff] %v411
        // Predicated region
        $region53: #{tpu_custom_call.1} parent=35 // pred_check
          %p414 = pneg %p389
        $region54: #{tpu_custom_call.1} parent=35 // pred_check_branch
          %416 = sbr.rel (%p414) target = $region56
        $region55: #{tpu_custom_call.1} parent=35 // pred_region
          %v417 = vld [vmem:[#allocation2] sm:$0xff]
          %v418 = vld [vmem:[#allocation2 + $0x8] sm:$0xff]
          %419 = vst [vmem:[%s256] sm:$0xff] %v417
          %420 = vst [vmem:[%s256 + $0x8] sm:$0xff] %v418
        $region56: #{tpu_custom_call.1} parent=35 // pred_fallthru
          _
        %s421 = sand.u32 %s132, 1
        %s422 = scalar_lea.sflag [#allocation5], %s421
        %s423 = sand.u32 %s132, 1
        %s424 = smul.addr %s423, 16
        %s425 = scalar_lea.vmem [#allocation10], %s424
        // Predicated region
        $region57: #{tpu_custom_call.1} parent=35 // pred_check
          %p426 = pneg %p142
        $region58: #{tpu_custom_call.1} parent=35 // pred_check_branch
          %428 = sbr.rel (%p426) target = $region60
        $region59: #{tpu_custom_call.1} parent=35 // pred_region
          %s429 = smul.u32 2, %s27
          %s431 = ssub.s32 256, 256
          %432 = vsyncadd %s422, %s431
          %s433 = smul.addr %s429, 128
          %s434 = scalar_lea.hbm %s4, %s433
          %s435 = sshll.u32 %s425, 4
          %s436 = int_to_ptr.vmem [resolvable:$true] %s435
          %441 = dma.vmem_to_hbm [thread:$0]  %s436, 256, %s434, %s422, 128, 128, 8
        $region60: #{tpu_custom_call.1} parent=35 // pred_fallthru
          _
      $region36: #{tpu_custom_call.1} parent=5 // pred_fallthru
        _
      %p442 = scmp.le.s32.totalorder 2, %s18
      // Predicated region
      $region61: #{tpu_custom_call.1} parent=5 // pred_check
        %p443 = pneg %p442
      $region62: #{tpu_custom_call.1} parent=5 // pred_check_branch
        %445 = sbr.rel (%p443) target = $region64
      $region63: #{tpu_custom_call.1} parent=5 // pred_region
        %s446 = ssub.s32 %s18, 2
        // Predicated region
        $region65: #{tpu_custom_call.1} parent=63 // pred_check
          %p447 = pneg %p148
        $region66: #{tpu_custom_call.1} parent=63 // pred_check_branch
          %449 = sbr.rel (%p447) target = $region68
        $region67: #{tpu_custom_call.1} parent=63 // pred_region
          %s450 = sand.u32 %s133, 1
          %s451 = scalar_lea.sflag [#allocation5], %s450
          %s452 = sand.u32 %s133, 1
          %s453 = smul.addr %s452, 16
          %s454 = scalar_lea.vmem [#allocation10], %s453
          %455 = dma.done %s451, 256
        $region68: #{tpu_custom_call.1} parent=63 // pred_fallthru
          _
      $region64: #{tpu_custom_call.1} parent=5 // pred_fallthru
        _
    $region6: #{tpu_custom_call.1} parent=1 // loop_footer
      %s22 = sadd.s32 1, %s18
    $region7: #{tpu_custom_call.1} parent=1 // loop_footer_branch
      %17 = sbr.rel target = $region3
    $region8: #{tpu_custom_call.1} parent=1 // loop_exit
      _
    %456 = vsyncpa [#allocation4], 1
    %s457 = scalar_lea.sflag [#allocation4], 1
    %458 = vsyncpa %s457, 1
    %459 = vsyncpa [#allocation8], 1
    %460 = vsyncpa [#allocation5], 1
    %s461 = scalar_lea.sflag [#allocation5], 1
    %462 = vsyncpa %s461, 1
    %463 = vsyncpa [#allocation6], 1
    %s464 = scalar_lea.sflag [#allocation6], 1
    %465 = vsyncpa %s464, 1

</llo_original>
